<compile_context>
chip_gen: v6e
topology: v6e:2x2x1
jax: 0.10.0
libtpu: 0.0.40
codegen_flags: <defaults>
</compile_context>

<pallas_src>
import functools

import jax
import jax.numpy as jnp
from jax.experimental import pallas as pl
from jax.experimental.pallas import tpu as pltpu


def _rotate_kernel(rot_ref, pts_ref, out_ref):
    # rot_ref: (9,) f32 rotation matrix (row-major R[k, j]) in SMEM.
    # pts_ref: (3, TILE_N) coordinate-major points in VMEM.
    # out_ref: (3, TILE_N) rotated points in VMEM.
    pts = pts_ref[...]                       # (3, TILE_N)
    x = pts[0:1, :]
    y = pts[1:2, :]
    z = pts[2:3, :]
    # out = P @ R  ->  out_cm[j, :] = sum_k R[k, j] * pts_cm[k, :]
    out_ref[0:1, :] = rot_ref[0] * x + rot_ref[3] * y + rot_ref[6] * z
    out_ref[1:2, :] = rot_ref[1] * x + rot_ref[4] * y + rot_ref[7] * z
    out_ref[2:3, :] = rot_ref[2] * x + rot_ref[5] * y + rot_ref[8] * z


@functools.partial(jax.jit, static_argnames=("tile_n",))
def _rotate_points_pallas(point_set, rot_mat, *, tile_n=2048):
    """point_set: (N, 3) f32, rot_mat: (3, 3) f32 -> (N, 3) f32 (Pallas path)."""
    n, d = point_set.shape
    assert d == 3
    n_pad = ((n + tile_n - 1) // tile_n) * tile_n

    # Present the data lane-dense (coordinate-major); pad the tail tile.
    pts_cm = point_set.T                             # (3, n)
    if n_pad != n:
        pts_cm = jnp.pad(pts_cm, ((0, 0), (0, n_pad - n)))
    rot_flat = rot_mat.reshape(9).astype(jnp.float32)

    out_cm = pl.pallas_call(
        _rotate_kernel,
        out_shape=jax.ShapeDtypeStruct((3, n_pad), point_set.dtype),
        grid_spec=pltpu.PrefetchScalarGridSpec(
            num_scalar_prefetch=0,
            grid=(n_pad // tile_n,),
            in_specs=[
                # 9 rotation coefficients: scalars in SMEM, no VMEM stream.
                pl.BlockSpec(memory_space=pltpu.MemorySpace.SMEM),
                # coordinate-major point tiles, lane dim = tile_n (dense).
                pl.BlockSpec((3, tile_n), lambda i: (0, i)),
            ],
            out_specs=pl.BlockSpec((3, tile_n), lambda i: (0, i)),
        ),
        compiler_params=pltpu.CompilerParams(
            dimension_semantics=("parallel",),
        ),
    )(rot_flat, pts_cm)

    return out_cm[:, :n].T


def rotate_points(point_set, rot_mat, *, tile_n=2048, min_pallas_points=1024):
    """Dispatch: tiny clouds go straight to XLA (launch overhead > work)."""
    n = point_set.shape[0]
    if n < min_pallas_points:
        return point_set @ rot_mat
    return _rotate_points_pallas(point_set, rot_mat, tile_n=tile_n)


def make_rotation_matrix(key, rotation_range):
    """Plain-JAX glue: sample 3 angles and build R_x @ R_y @ R_z (matches numpy code)."""
    lo, hi = rotation_range
    t1, t2, t3 = jax.random.uniform(
        key, (3,), minval=lo, maxval=hi, dtype=jnp.float32
    )
    c1, s1 = jnp.cos(t1), jnp.sin(t1)
    c2, s2 = jnp.cos(t2), jnp.sin(t2)
    c3, s3 = jnp.cos(t3), jnp.sin(t3)
    one = jnp.float32(1.0)
    zero = jnp.float32(0.0)
    rot_1 = jnp.array([[one, zero, zero],
                       [zero, c1, -s1],
                       [zero, s1, c1]], dtype=jnp.float32)
    rot_2 = jnp.array([[c2, zero, s2],
                       [zero, one, zero],
                       [-s2, zero, c2]], dtype=jnp.float32)
    rot_3 = jnp.array([[c3, -s3, zero],
                       [s3, c3, zero],
                       [zero, zero, one]], dtype=jnp.float32)
    return (rot_1 @ rot_2 @ rot_3).astype(jnp.float32)


class RandomRotate3d:
    """JAX/Pallas port of the PyTorch RandomRotate3d module."""

    def __init__(self, rotation_range):
        self.rotation_range = rotation_range

    def __call__(self, point_set, key):
        # TODO(synk): PyTorch uses host-side np.random state; here randomness is
        # an explicit jax.random key.
        rot_mat = make_rotation_matrix(key, self.rotation_range)
        return rotate_points(point_set, rot_mat)

    def __repr__(self):
        return f"{self.__class__.__name__}(theta={self.rotation_range})"


if __name__ == "__main__":
    key = jax.random.PRNGKey(0)
    k_pts, k_rot = jax.random.split(key)

    # Typical ShapeNet-style point cloud; not a multiple of tile_n on purpose
    # (exercises the tail-padding path). Uses the Pallas path (n >= 1024).
    n_points = 2500
    point_set = jax.random.normal(k_pts, (n_points, 3), dtype=jnp.float32)

    module = RandomRotate3d(rotation_range=(-jnp.pi, jnp.pi))
    out = module(point_set, k_rot)
    out = jax.block_until_ready(out)

    # Reference check against plain-JAX matmul.
    rot_mat = make_rotation_matrix(k_rot, module.rotation_range)
    ref = point_set @ rot_mat
    assert out.shape == (n_points, 3)
    assert jnp.allclose(out, ref, atol=1e-5), "mismatch vs reference"

    print("KERNEL_OK")
</pallas_src>

<mosaic_0001>
module attributes {stable_mosaic.version = 11 : i64} {
  func.func @_rotate_kernel(%arg0: i32, %arg1: memref<9xf32, #tpu.memory_space<smem>>, %arg2: memref<3x2048xf32, #tpu.memory_space<vmem>>, %arg3: memref<3x2048xf32, #tpu.memory_space<vmem>>) attributes {dimension_semantics = [#tpu.dimension_semantics<parallel>], iteration_bounds = array<i64: 2>, scalar_prefetch = 0 : i64, scratch_operands = 0 : i64, tpu.core_type = #tpu.core_type<tc>, window_params = [{transform_indices = @transform_0, window_bounds = array<i64: 9>}, {transform_indices = @transform_1, window_bounds = array<i64: 3, 2048>}, {transform_indices = @transform_2, window_bounds = array<i64: 3, 2048>}]} {
    %c0 = arith.constant 0 : index
    %c0_0 = arith.constant 0 : index
    %0 = vector.load %arg2[%c0, %c0_0] : memref<3x2048xf32, #tpu.memory_space<vmem>>, vector<3x2048xf32>
    %1 = vector.extract_strided_slice %0 {offsets = [0, 0], sizes = [1, 2048], strides = [1, 1]} : vector<3x2048xf32> to vector<1x2048xf32>
    %2 = vector.extract_strided_slice %0 {offsets = [1, 0], sizes = [1, 2048], strides = [1, 1]} : vector<3x2048xf32> to vector<1x2048xf32>
    %3 = vector.extract_strided_slice %0 {offsets = [2, 0], sizes = [1, 2048], strides = [1, 1]} : vector<3x2048xf32> to vector<1x2048xf32>
    %c0_1 = arith.constant 0 : index
    %4 = memref.load %arg1[%c0_1] : memref<9xf32, #tpu.memory_space<smem>>
    %5 = vector.broadcast %4 : f32 to vector<1x2048xf32>
    %6 = arith.mulf %5, %1 : vector<1x2048xf32>
    %c3 = arith.constant 3 : index
    %7 = memref.load %arg1[%c3] : memref<9xf32, #tpu.memory_space<smem>>
    %8 = vector.broadcast %7 : f32 to vector<1x2048xf32>
    %9 = arith.mulf %8, %2 : vector<1x2048xf32>
    %10 = arith.addf %6, %9 : vector<1x2048xf32>
    %c6 = arith.constant 6 : index
    %11 = memref.load %arg1[%c6] : memref<9xf32, #tpu.memory_space<smem>>
    %12 = vector.broadcast %11 : f32 to vector<1x2048xf32>
    %13 = arith.mulf %12, %3 : vector<1x2048xf32>
    %14 = arith.addf %10, %13 : vector<1x2048xf32>
    %c0_2 = arith.constant 0 : index
    %c0_3 = arith.constant 0 : index
    %15 = vector.load %arg3[%c0_2, %c0_3] : memref<3x2048xf32, #tpu.memory_space<vmem>>, vector<1x2048xf32>
    tpu.vector_store %arg3[%c0_2, %c0_3], %14 {strides = array<i32>} : memref<3x2048xf32, #tpu.memory_space<vmem>>, vector<1x2048xf32>,
    %c1 = arith.constant 1 : index
    %16 = memref.load %arg1[%c1] : memref<9xf32, #tpu.memory_space<smem>>
    %17 = vector.broadcast %16 : f32 to vector<1x2048xf32>
    %18 = arith.mulf %17, %1 : vector<1x2048xf32>
    %c4 = arith.constant 4 : index
    %19 = memref.load %arg1[%c4] : memref<9xf32, #tpu.memory_space<smem>>
    %20 = vector.broadcast %19 : f32 to vector<1x2048xf32>
    %21 = arith.mulf %20, %2 : vector<1x2048xf32>
    %22 = arith.addf %18, %21 : vector<1x2048xf32>
    %c7 = arith.constant 7 : index
    %23 = memref.load %arg1[%c7] : memref<9xf32, #tpu.memory_space<smem>>
    %24 = vector.broadcast %23 : f32 to vector<1x2048xf32>
    %25 = arith.mulf %24, %3 : vector<1x2048xf32>
    %26 = arith.addf %22, %25 : vector<1x2048xf32>
    %c1_4 = arith.constant 1 : index
    %c0_5 = arith.constant 0 : index
    %27 = vector.load %arg3[%c1_4, %c0_5] : memref<3x2048xf32, #tpu.memory_space<vmem>>, vector<1x2048xf32>
    tpu.vector_store %arg3[%c1_4, %c0_5], %26 {strides = array<i32>} : memref<3x2048xf32, #tpu.memory_space<vmem>>, vector<1x2048xf32>,
    %c2 = arith.constant 2 : index
    %28 = memref.load %arg1[%c2] : memref<9xf32, #tpu.memory_space<smem>>
    %29 = vector.broadcast %28 : f32 to vector<1x2048xf32>
    %30 = arith.mulf %29, %1 : vector<1x2048xf32>
    %c5 = arith.constant 5 : index
    %31 = memref.load %arg1[%c5] : memref<9xf32, #tpu.memory_space<smem>>
    %32 = vector.broadcast %31 : f32 to vector<1x2048xf32>
    %33 = arith.mulf %32, %2 : vector<1x2048xf32>
    %34 = arith.addf %30, %33 : vector<1x2048xf32>
    %c8 = arith.constant 8 : index
    %35 = memref.load %arg1[%c8] : memref<9xf32, #tpu.memory_space<smem>>
    %36 = vector.broadcast %35 : f32 to vector<1x2048xf32>
    %37 = arith.mulf %36, %3 : vector<1x2048xf32>
    %38 = arith.addf %34, %37 : vector<1x2048xf32>
    %c2_6 = arith.constant 2 : index
    %c0_7 = arith.constant 0 : index
    %39 = vector.load %arg3[%c2_6, %c0_7] : memref<3x2048xf32, #tpu.memory_space<vmem>>, vector<1x2048xf32>
    tpu.vector_store %arg3[%c2_6, %c0_7], %38 {strides = array<i32>} : memref<3x2048xf32, #tpu.memory_space<vmem>>, vector<1x2048xf32>,
    return
  }
  func.func @transform_0(%arg0: i32) -> i32 {
    %c0_i32 = arith.constant 0 : i32
    %c0_i32_0 = arith.constant 0 : i32
    return %c0_i32 : i32
  }
  func.func @transform_1(%arg0: i32) -> (i32, i32) {
    %c0_i32 = arith.constant 0 : i32
    %c0_i32_0 = arith.constant 0 : i32
    return %c0_i32, %arg0 : i32, i32
  }
  func.func @transform_2(%arg0: i32) -> (i32, i32) {
    %c0_i32 = arith.constant 0 : i32
    %c0_i32_0 = arith.constant 0 : i32
    return %c0_i32, %arg0 : i32, i32
  }
}

</mosaic_0001>

<llo_original>
// kernel: _rotate_points_pallas.1
$region0: #{_rotate_points_pallas.1}
  #allocation0 [shape = 'u32[]', space=smem, size = 0x4, offset = 0x4, fixed_abs, tag = 'smem constant byte address 0x4 - core index']
  #allocation1 [shape = 'u32[144,128]{1,0:T(1,128)}', space=vmem, size = 0x12000, scoped, tag = 'internal scratch']
  %s0 = inlined_call_operand.vmem [shape: f32[9], index: 0, kind: input, shape index: {}]
  %s1 = inlined_call_operand.vmem [shape: f32[3,4096], index: 1, kind: input, shape index: {}]
  %s2 = inlined_call_operand.vmem [shape: f32[3,4096], index: 2, kind: output, shape index: {}]
  %s3 = sld [smem:[#allocation0]]
  $region45: #{_rotate_points_pallas.1} parent=0
    _
  %s5 = ssub.s32 1, %s3
  %s6 = scalar_select 0, %s5, %s3
  $region1: #{_rotate_points_pallas.1} parent=0
    #allocation2 [shape = 'u8[512]{0}', space=smem, size = 0x200, scoped, tag = 'input window, operand 0, single buffered']
    #allocation3 [shape = 's32[2]{0}', space=sflag, size = 0x8, scoped, tag = 'scoped memory for _rotate_points_pallas.1']
    %7 = vsyncpa [#allocation3], 0
    loop: start=0, step=1, limit=4
    $region2: #{_rotate_points_pallas.1} parent=1 // loop_pre_header
      _
    $region3: #{_rotate_points_pallas.1} parent=1 // loop_header
      %s9 = sphi 0, %s13
      %p10 = scmp.ge.s32.totalorder %s9, 4
      %s17 = sphi 0, %s17
      %s19 = sphi 0, %s17
      %s20 = sphi 0, %s19
      %s34 = sphi 0, %s20
      %s40 = sphi 0, %s42
      %s43 = sphi 0, %s40
      %s44 = sphi 0, %s43
      %s60 = sphi 0, %s44
      %s66 = sphi 0, %s68
      %s69 = sphi 0, %s66
      %s70 = sphi 0, %s69
      %s86 = sphi 0, %s70
    $region4: #{_rotate_points_pallas.1} parent=1 // loop_header_branch
      %12 = sbr.rel (%p10) target = $region8
    $region5: #{_rotate_points_pallas.1} parent=1 // loop_body
      %s14 = ssub.s32 %s9, 1
      %s15 = ssub.s32 %s9, 2
      %s16 = sadd.s32 %s9, 1
      %s18 = sadd.s32 %s17, 1
      %p21 = scmp.eq.s32.totalorder %s9, 1
      %p22 = scmp.ne.s32.totalorder %s17, %s19
      %p23 = scmp.eq.s32.totalorder %s9, 0
      %p24 = por %p22, %p23
      %p25 = scmp.ne.s32.totalorder %s17, %s19
      %p26 = scmp.eq.s32.totalorder %s14, 1
      %p27 = por %p25, %p26
      %p28 = scmp.ne.s32.totalorder %s19, %s20
      %p29 = scmp.eq.s32.totalorder %s14, 0
      %p30 = por %p28, %p29
      %p31 = scmp.ne.s32.totalorder %s19, %s20
      %p32 = scmp.eq.s32.totalorder %s15, 1
      %p33 = por %p31, %p32
      %p35 = scmp.ne.s32.totalorder %s20, %s34
      %p36 = scmp.eq.s32.totalorder %s15, 0
      %p37 = por %p35, %p36
      %s38 = ssub.s32 %s9, %s16
      %p39 = scmp.eq.s32.totalorder %s38, 0
      %s41 = sadd.s32 %s40, 1
      %s42 = scalar_select %p39, %s40, %s41
      %p45 = pneg %p39
      %p46 = scmp.eq.s32.totalorder %s9, 1
      %p47 = por %p45, %p46
      %p48 = scmp.ne.s32.totalorder %s40, %s43
      %p49 = scmp.eq.s32.totalorder %s9, 0
      %p50 = por %p48, %p49
      %p51 = scmp.ne.s32.totalorder %s40, %s43
      %p52 = scmp.eq.s32.totalorder %s14, 1
      %p53 = por %p51, %p52
      %p54 = scmp.ne.s32.totalorder %s43, %s44
      %p55 = scmp.eq.s32.totalorder %s14, 0
      %p56 = por %p54, %p55
      %p57 = scmp.ne.s32.totalorder %s43, %s44
      %p58 = scmp.eq.s32.totalorder %s15, 1
      %p59 = por %p57, %p58
      %p61 = scmp.ne.s32.totalorder %s44, %s60
      %p62 = scmp.eq.s32.totalorder %s15, 0
      %p63 = por %p61, %p62
      %s64 = ssub.s32 %s9, %s16
      %p65 = scmp.eq.s32.totalorder %s64, 0
      %s67 = sadd.s32 %s66, 1
      %s68 = scalar_select %p65, %s66, %s67
      %p71 = pneg %p65
      %p72 = scmp.eq.s32.totalorder %s9, 1
      %p73 = por %p71, %p72
      %p74 = scmp.ne.s32.totalorder %s66, %s69
      %p75 = scmp.eq.s32.totalorder %s9, 0
      %p76 = por %p74, %p75
      %p77 = scmp.ne.s32.totalorder %s66, %s69
      %p78 = scmp.eq.s32.totalorder %s14, 1
      %p79 = por %p77, %p78
      %p80 = scmp.ne.s32.totalorder %s69, %s70
      %p81 = scmp.eq.s32.totalorder %s14, 0
      %p82 = por %p80, %p81
      %p83 = scmp.ne.s32.totalorder %s69, %s70
      %p84 = scmp.eq.s32.totalorder %s15, 1
      %p85 = por %p83, %p84
      %p87 = scmp.ne.s32.totalorder %s70, %s86
      %p88 = scmp.eq.s32.totalorder %s15, 0
      %p89 = por %p87, %p88
      %p90 = scmp.le.s32.totalorder 1, %s9
      %p91 = scmp.lt.s32.totalorder %s9, 3
      %p92 = pnand %p90, %p91
      %p93 = pneg %p92
      // Predicated region
      $region9: #{_rotate_points_pallas.1} parent=5 // pred_check
        _
      $region10: #{_rotate_points_pallas.1} parent=5 // pred_check_branch
        %95 = sbr.rel (%p92) target = $region12
      $region11: #{_rotate_points_pallas.1} parent=5 // pred_region
        %s96 = ssub.s32 %s9, 1
        // Predicated region
        $region13: #{_rotate_points_pallas.1} parent=11 // pred_check
          %p97 = pneg %p30
        $region14: #{_rotate_points_pallas.1} parent=11 // pred_check_branch
          %99 = sbr.rel (%p97) target = $region16
        $region15: #{_rotate_points_pallas.1} parent=11 // pred_region
          %s101 = ssub.s32 16, 16
          %102 = vsyncadd [#allocation3], %s101
          %s104 = sshll.u32 %s0, 4
          %s105 = int_to_ptr.vmem [resolvable:$true] %s104
          %107 = dma.vmem_to_smem %s105, 16, [#allocation2], [#allocation3]
        $region16: #{_rotate_points_pallas.1} parent=11 // pred_fallthru
          _
      $region12: #{_rotate_points_pallas.1} parent=5 // pred_fallthru
        _
      %p108 = scmp.lt.s32.totalorder %s9, 2
      // Predicated region
      $region17: #{_rotate_points_pallas.1} parent=5 // pred_check
        %p109 = pneg %p108
      $region18: #{_rotate_points_pallas.1} parent=5 // pred_check_branch
        %111 = sbr.rel (%p109) target = $region20
      $region19: #{_rotate_points_pallas.1} parent=5 // pred_region
        // Predicated region
        $region21: #{_rotate_points_pallas.1} parent=19 // pred_check
          %p112 = pneg %p50
        $region22: #{_rotate_points_pallas.1} parent=19 // pred_check_branch
          %114 = sbr.rel (%p112) target = $region24
        $region23: #{_rotate_points_pallas.1} parent=19 // pred_region
          %s115 = smul.u32 16, %s9
          %p116 = scmp.lt.s32.totalorder %s115, 31
          %s117 = scalar_select %p116, %s115, 31
          %s118 = smul.addr %s117, 4
          %s119 = scalar_lea.vmem %s1, %s118
          %s120 = smul.u32 16, %s9
        $region24: #{_rotate_points_pallas.1} parent=19 // pred_fallthru
          _
      $region20: #{_rotate_points_pallas.1} parent=5 // pred_fallthru
        _
      %p121 = scmp.le.s32.totalorder 1, %s9
      %p122 = scmp.lt.s32.totalorder %s9, 3
      %p123 = pnand %p121, %p122
      %p124 = pneg %p123
      // Predicated region
      $region25: #{_rotate_points_pallas.1} parent=5 // pred_check
        _
      $region26: #{_rotate_points_pallas.1} parent=5 // pred_check_branch
        %126 = sbr.rel (%p123) target = $region28
      $region27: #{_rotate_points_pallas.1} parent=5 // pred_region
        %s127 = ssub.s32 %s9, 1
        // Predicated region
        $region29: #{_rotate_points_pallas.1} parent=27 // pred_check
          %p128 = pneg %p30
        $region30: #{_rotate_points_pallas.1} parent=27 // pred_check_branch
          %130 = sbr.rel (%p128) target = $region32
        $region31: #{_rotate_points_pallas.1} parent=27 // pred_region
          %131 = dma.done [#allocation3], 16
        $region32: #{_rotate_points_pallas.1} parent=27 // pred_fallthru
          _
        %132 = sfence
        %p133 = pneg %p30
        %p134 = pneg %p27
        %s135 = smul.u32 16, %s14
        %p136 = scmp.lt.s32.totalorder %s135, 31
        %s137 = scalar_select %p136, %s135, 31
        %s138 = smul.addr %s137, 4
        %s139 = scalar_lea.vmem %s1, %s138
        %p140 = pneg %p56
        %p141 = pneg %p53
        %p142 = pneg %p82
        %p143 = pneg %p79
        %s144 = smul.u32 16, %s14
        %p145 = scmp.lt.s32.totalorder %s144, 31
        %s146 = scalar_select %p145, %s144, 31
        %s147 = smul.addr %s146, 4
        %s148 = scalar_lea.vmem %s2, %s147
        %s149 = smul.u32 16, %s14
        %p150 = scmp.lt.s32.totalorder %s149, 31
        %s151 = scalar_select %p150, %s149, 31
        %s152 = smul.addr %s151, 4
        %s153 = scalar_lea.vmem %s1, %s152
        %s154 = smul.u32 16, %s14
        %s155 = smul.u32 16, %s14
        %p156 = scmp.lt.s32.totalorder %s155, 31
        %s157 = scalar_select %p156, %s155, 31
        %s158 = smul.addr %s157, 4
        %s159 = scalar_lea.vmem %s2, %s158
        %s160 = smul.u32 16, %s14
        %v161 = vld [vmem:[%s153] sm:$0x77]
        %v162 = vld [vmem:[%s153 + $0x8] sm:$0x77]
        %v163 = vld [vmem:[%s153 + $0x10] sm:$0x77]
        %v164 = vld [vmem:[%s153 + $0x18] sm:$0x77]
        %v165 = vld [vmem:[%s153 + $0x20] sm:$0x77]
        %v166 = vld [vmem:[%s153 + $0x28] sm:$0x77]
        %v167 = vld [vmem:[%s153 + $0x30] sm:$0x77]
        %v168 = vld [vmem:[%s153 + $0x38] sm:$0x77]
        %s169 = sld [smem:[#allocation2]]
        %v170 = vstv %s169
        %v171 = vmul.f32 %v170, %v161
        %v172 = vmul.f32 %v170, %v162
        %v173 = vmul.f32 %v170, %v163
        %v174 = vmul.f32 %v170, %v164
        %v175 = vmul.f32 %v170, %v165
        %v176 = vmul.f32 %v170, %v166
        %v177 = vmul.f32 %v170, %v167
        %v178 = vmul.f32 %v170, %v168
        %s179 = sld [smem:[#allocation2 + $0x3]]
        %v180 = vstv %s179
        %v181 = vmul.f32 %v180, %v161
        %v182 = vmul.f32 %v180, %v162
        %v183 = vmul.f32 %v180, %v163
        %v184 = vmul.f32 %v180, %v164
        %v185 = vmul.f32 %v180, %v165
        %v186 = vmul.f32 %v180, %v166
        %v187 = vmul.f32 %v180, %v167
        %v188 = vmul.f32 %v180, %v168
        %v197 = vrot.slane %v181, 5
        %v198 = vrot.slane %v197, 4
        %v199 = vrot.slane %v182, 5
        %v200 = vrot.slane %v199, 4
        %v201 = vrot.slane %v183, 5
        %v202 = vrot.slane %v201, 4
        %v203 = vrot.slane %v184, 5
        %v204 = vrot.slane %v203, 4
        %v205 = vrot.slane %v185, 5
        %v206 = vrot.slane %v205, 4
        %v207 = vrot.slane %v186, 5
        %v208 = vrot.slane %v207, 4
        %v209 = vrot.slane %v187, 5
        %v210 = vrot.slane %v209, 4
        %v211 = vrot.slane %v188, 5
        %v212 = vrot.slane %v211, 4
        %v221 = vadd.f32 %v171, %v198
        %v222 = vadd.f32 %v172, %v200
        %v223 = vadd.f32 %v173, %v202
        %v224 = vadd.f32 %v174, %v204
        %v225 = vadd.f32 %v175, %v206
        %v226 = vadd.f32 %v176, %v208
        %v227 = vadd.f32 %v177, %v210
        %v228 = vadd.f32 %v178, %v212
        %s229 = sld [smem:[#allocation2 + $0x6]]
        %v230 = vstv %s229
        %v231 = vmul.f32 %v230, %v161
        %v232 = vmul.f32 %v230, %v162
        %v233 = vmul.f32 %v230, %v163
        %v234 = vmul.f32 %v230, %v164
        %v235 = vmul.f32 %v230, %v165
        %v236 = vmul.f32 %v230, %v166
        %v237 = vmul.f32 %v230, %v167
        %v238 = vmul.f32 %v230, %v168
        %v247 = vrot.slane %v231, 6
        %v248 = vrot.slane %v247, 4
        %v249 = vrot.slane %v232, 6
        %v250 = vrot.slane %v249, 4
        %v251 = vrot.slane %v233, 6
        %v252 = vrot.slane %v251, 4
        %v253 = vrot.slane %v234, 6
        %v254 = vrot.slane %v253, 4
        %v255 = vrot.slane %v235, 6
        %v256 = vrot.slane %v255, 4
        %v257 = vrot.slane %v236, 6
        %v258 = vrot.slane %v257, 4
        %v259 = vrot.slane %v237, 6
        %v260 = vrot.slane %v259, 4
        %v261 = vrot.slane %v238, 6
        %v262 = vrot.slane %v261, 4
        %v271 = vadd.f32 %v221, %v248
        %v272 = vadd.f32 %v222, %v250
        %v273 = vadd.f32 %v223, %v252
        %v274 = vadd.f32 %v224, %v254
        %v275 = vadd.f32 %v225, %v256
        %v276 = vadd.f32 %v226, %v258
        %v277 = vadd.f32 %v227, %v260
        %v278 = vadd.f32 %v228, %v262
        %v288 = vunpack.c.l.s4 1966171168
        %v289 = vunpack.c.0.s8 %v288
        %v290 = vlaneseq
        %v291 = vshrl.u32 %v290, 7
        %v292 = vsub.s32 %v289, %v291
        %v293 = vrot.slane %v271, %v292
        %v295 = vunpack.c.l.s4 1966171168
        %v296 = vunpack.c.0.s8 %v295
        %v297 = vlaneseq
        %v298 = vshrl.u32 %v297, 7
        %v299 = vsub.s32 %v296, %v298
        %v300 = vrot.slane %v272, %v299
        %v302 = vunpack.c.l.s4 1966171168
        %v303 = vunpack.c.0.s8 %v302
        %v304 = vlaneseq
        %v305 = vshrl.u32 %v304, 7
        %v306 = vsub.s32 %v303, %v305
        %v307 = vrot.slane %v273, %v306
        %v309 = vunpack.c.l.s4 1966171168
        %v310 = vunpack.c.0.s8 %v309
        %v311 = vlaneseq
        %v312 = vshrl.u32 %v311, 7
        %v313 = vsub.s32 %v310, %v312
        %v314 = vrot.slane %v274, %v313
        %v315 = vcombine.low %v293, %v300
        %v316 = vcombine.low %v307, %v314
        %v318 = vunpack.c.l.s4 1966171168
        %v319 = vunpack.c.0.s8 %v318
        %v320 = vlaneseq
        %v321 = vshrl.u32 %v320, 7
        %v322 = vsub.s32 %v319, %v321
        %v323 = vrot.slane %v315, %v322
        %v325 = vunpack.c.l.s4 1966171168
        %v326 = vunpack.c.0.s8 %v325
        %v327 = vlaneseq
        %v328 = vshrl.u32 %v327, 7
        %v329 = vsub.s32 %v326, %v328
        %v330 = vrot.slane %v316, %v329
        %v331 = vcombine.low %v323, %v330
        %v333 = vunpack.c.l.s4 1966171168
        %v334 = vunpack.c.0.s8 %v333
        %v335 = vlaneseq
        %v336 = vshrl.u32 %v335, 7
        %v337 = vsub.s32 %v334, %v336
        %v338 = vrot.slane %v275, %v337
        %v340 = vunpack.c.l.s4 1966171168
        %v341 = vunpack.c.0.s8 %v340
        %v342 = vlaneseq
        %v343 = vshrl.u32 %v342, 7
        %v344 = vsub.s32 %v341, %v343
        %v345 = vrot.slane %v276, %v344
        %v347 = vunpack.c.l.s4 1966171168
        %v348 = vunpack.c.0.s8 %v347
        %v349 = vlaneseq
        %v350 = vshrl.u32 %v349, 7
        %v351 = vsub.s32 %v348, %v350
        %v352 = vrot.slane %v277, %v351
        %v354 = vunpack.c.l.s4 1966171168
        %v355 = vunpack.c.0.s8 %v354
        %v356 = vlaneseq
        %v357 = vshrl.u32 %v356, 7
        %v358 = vsub.s32 %v355, %v357
        %v359 = vrot.slane %v278, %v358
        %v360 = vcombine.low %v338, %v345
        %v361 = vcombine.low %v352, %v359
        %v363 = vunpack.c.l.s4 1966171168
        %v364 = vunpack.c.0.s8 %v363
        %v365 = vlaneseq
        %v366 = vshrl.u32 %v365, 7
        %v367 = vsub.s32 %v364, %v366
        %v368 = vrot.slane %v360, %v367
        %v370 = vunpack.c.l.s4 1966171168
        %v371 = vunpack.c.0.s8 %v370
        %v372 = vlaneseq
        %v373 = vshrl.u32 %v372, 7
        %v374 = vsub.s32 %v371, %v373
        %v375 = vrot.slane %v361, %v374
        %v376 = vcombine.low %v368, %v375
        %379 = vst [vmem:[%s159] ss:$4 sm:$0xff] %v331
        %s380 = scalar_lea.vmem %s159, 32
        %381 = vst [vmem:[%s380] ss:$4 sm:$0xff] %v376
        %s382 = sld [smem:[#allocation2 + $0x1]]
        %v383 = vstv %s382
        %v384 = vmul.f32 %v383, %v161
        %v385 = vmul.f32 %v383, %v162
        %v386 = vmul.f32 %v383, %v163
        %v387 = vmul.f32 %v383, %v164
        %v388 = vmul.f32 %v383, %v165
        %v389 = vmul.f32 %v383, %v166
        %v390 = vmul.f32 %v383, %v167
        %v391 = vmul.f32 %v383, %v168
        %s392 = sld [smem:[#allocation2 + $0x4]]
        %v393 = vstv %s392
        %v394 = vmul.f32 %v393, %v161
        %v395 = vmul.f32 %v393, %v162
        %v396 = vmul.f32 %v393, %v163
        %v397 = vmul.f32 %v393, %v164
        %v398 = vmul.f32 %v393, %v165
        %v399 = vmul.f32 %v393, %v166
        %v400 = vmul.f32 %v393, %v167
        %v401 = vmul.f32 %v393, %v168
        %v410 = vrot.slane %v394, 5
        %v411 = vrot.slane %v410, 4
        %v412 = vrot.slane %v395, 5
        %v413 = vrot.slane %v412, 4
        %v414 = vrot.slane %v396, 5
        %v415 = vrot.slane %v414, 4
        %v416 = vrot.slane %v397, 5
        %v417 = vrot.slane %v416, 4
        %v418 = vrot.slane %v398, 5
        %v419 = vrot.slane %v418, 4
        %v420 = vrot.slane %v399, 5
        %v421 = vrot.slane %v420, 4
        %v422 = vrot.slane %v400, 5
        %v423 = vrot.slane %v422, 4
        %v424 = vrot.slane %v401, 5
        %v425 = vrot.slane %v424, 4
        %v434 = vadd.f32 %v384, %v411
        %v435 = vadd.f32 %v385, %v413
        %v436 = vadd.f32 %v386, %v415
        %v437 = vadd.f32 %v387, %v417
        %v438 = vadd.f32 %v388, %v419
        %v439 = vadd.f32 %v389, %v421
        %v440 = vadd.f32 %v390, %v423
        %v441 = vadd.f32 %v391, %v425
        %s442 = sld [smem:[#allocation2 + $0x7]]
        %v443 = vstv %s442
        %v444 = vmul.f32 %v443, %v161
        %v445 = vmul.f32 %v443, %v162
        %v446 = vmul.f32 %v443, %v163
        %v447 = vmul.f32 %v443, %v164
        %v448 = vmul.f32 %v443, %v165
        %v449 = vmul.f32 %v443, %v166
        %v450 = vmul.f32 %v443, %v167
        %v451 = vmul.f32 %v443, %v168
        %v460 = vrot.slane %v444, 6
        %v461 = vrot.slane %v460, 4
        %v462 = vrot.slane %v445, 6
        %v463 = vrot.slane %v462, 4
        %v464 = vrot.slane %v446, 6
        %v465 = vrot.slane %v464, 4
        %v466 = vrot.slane %v447, 6
        %v467 = vrot.slane %v466, 4
        %v468 = vrot.slane %v448, 6
        %v469 = vrot.slane %v468, 4
        %v470 = vrot.slane %v449, 6
        %v471 = vrot.slane %v470, 4
        %v472 = vrot.slane %v450, 6
        %v473 = vrot.slane %v472, 4
        %v474 = vrot.slane %v451, 6
        %v475 = vrot.slane %v474, 4
        %v484 = vadd.f32 %v434, %v461
        %v485 = vadd.f32 %v435, %v463
        %v486 = vadd.f32 %v436, %v465
        %v487 = vadd.f32 %v437, %v467
        %v488 = vadd.f32 %v438, %v469
        %v489 = vadd.f32 %v439, %v471
        %v490 = vadd.f32 %v440, %v473
        %v491 = vadd.f32 %v441, %v475
        %v501 = vunpack.c.l.s4 1966171168
        %v502 = vunpack.c.0.s8 %v501
        %v503 = vlaneseq
        %v504 = vshrl.u32 %v503, 7
        %v505 = vsub.s32 %v502, %v504
        %v506 = vrot.slane %v484, %v505
        %v508 = vunpack.c.l.s4 1966171168
        %v509 = vunpack.c.0.s8 %v508
        %v510 = vlaneseq
        %v511 = vshrl.u32 %v510, 7
        %v512 = vsub.s32 %v509, %v511
        %v513 = vrot.slane %v485, %v512
        %v515 = vunpack.c.l.s4 1966171168
        %v516 = vunpack.c.0.s8 %v515
        %v517 = vlaneseq
        %v518 = vshrl.u32 %v517, 7
        %v519 = vsub.s32 %v516, %v518
        %v520 = vrot.slane %v486, %v519
        %v522 = vunpack.c.l.s4 1966171168
        %v523 = vunpack.c.0.s8 %v522
        %v524 = vlaneseq
        %v525 = vshrl.u32 %v524, 7
        %v526 = vsub.s32 %v523, %v525
        %v527 = vrot.slane %v487, %v526
        %v528 = vcombine.low %v506, %v513
        %v529 = vcombine.low %v520, %v527
        %v531 = vunpack.c.l.s4 1966171168
        %v532 = vunpack.c.0.s8 %v531
        %v533 = vlaneseq
        %v534 = vshrl.u32 %v533, 7
        %v535 = vsub.s32 %v532, %v534
        %v536 = vrot.slane %v528, %v535
        %v538 = vunpack.c.l.s4 1966171168
        %v539 = vunpack.c.0.s8 %v538
        %v540 = vlaneseq
        %v541 = vshrl.u32 %v540, 7
        %v542 = vsub.s32 %v539, %v541
        %v543 = vrot.slane %v529, %v542
        %v544 = vcombine.low %v536, %v543
        %v546 = vunpack.c.l.s4 1966171168
        %v547 = vunpack.c.0.s8 %v546
        %v548 = vlaneseq
        %v549 = vshrl.u32 %v548, 7
        %v550 = vsub.s32 %v547, %v549
        %v551 = vrot.slane %v488, %v550
        %v553 = vunpack.c.l.s4 1966171168
        %v554 = vunpack.c.0.s8 %v553
        %v555 = vlaneseq
        %v556 = vshrl.u32 %v555, 7
        %v557 = vsub.s32 %v554, %v556
        %v558 = vrot.slane %v489, %v557
        %v560 = vunpack.c.l.s4 1966171168
        %v561 = vunpack.c.0.s8 %v560
        %v562 = vlaneseq
        %v563 = vshrl.u32 %v562, 7
        %v564 = vsub.s32 %v561, %v563
        %v565 = vrot.slane %v490, %v564
        %v567 = vunpack.c.l.s4 1966171168
        %v568 = vunpack.c.0.s8 %v567
        %v569 = vlaneseq
        %v570 = vshrl.u32 %v569, 7
        %v571 = vsub.s32 %v568, %v570
        %v572 = vrot.slane %v491, %v571
        %v573 = vcombine.low %v551, %v558
        %v574 = vcombine.low %v565, %v572
        %v576 = vunpack.c.l.s4 1966171168
        %v577 = vunpack.c.0.s8 %v576
        %v578 = vlaneseq
        %v579 = vshrl.u32 %v578, 7
        %v580 = vsub.s32 %v577, %v579
        %v581 = vrot.slane %v573, %v580
        %v583 = vunpack.c.l.s4 1966171168
        %v584 = vunpack.c.0.s8 %v583
        %v585 = vlaneseq
        %v586 = vshrl.u32 %v585, 7
        %v587 = vsub.s32 %v584, %v586
        %v588 = vrot.slane %v574, %v587
        %v589 = vcombine.low %v581, %v588
        %s592 = scalar_lea.vmem %s159, 1
        %593 = vst [vmem:[%s592] ss:$4 sm:$0xff] %v544
        %s594 = scalar_lea.vmem %s159, 33
        %595 = vst [vmem:[%s594] ss:$4 sm:$0xff] %v589
        %s596 = sld [smem:[#allocation2 + $0x2]]
        %v597 = vstv %s596
        %v598 = vmul.f32 %v597, %v161
        %v599 = vmul.f32 %v597, %v162
        %v600 = vmul.f32 %v597, %v163
        %v601 = vmul.f32 %v597, %v164
        %v602 = vmul.f32 %v597, %v165
        %v603 = vmul.f32 %v597, %v166
        %v604 = vmul.f32 %v597, %v167
        %v605 = vmul.f32 %v597, %v168
        %s606 = sld [smem:[#allocation2 + $0x5]]
        %v607 = vstv %s606
        %v608 = vmul.f32 %v607, %v161
        %v609 = vmul.f32 %v607, %v162
        %v610 = vmul.f32 %v607, %v163
        %v611 = vmul.f32 %v607, %v164
        %v612 = vmul.f32 %v607, %v165
        %v613 = vmul.f32 %v607, %v166
        %v614 = vmul.f32 %v607, %v167
        %v615 = vmul.f32 %v607, %v168
        %v624 = vrot.slane %v608, 5
        %v625 = vrot.slane %v624, 4
        %v626 = vrot.slane %v609, 5
        %v627 = vrot.slane %v626, 4
        %v628 = vrot.slane %v610, 5
        %v629 = vrot.slane %v628, 4
        %v630 = vrot.slane %v611, 5
        %v631 = vrot.slane %v630, 4
        %v632 = vrot.slane %v612, 5
        %v633 = vrot.slane %v632, 4
        %v634 = vrot.slane %v613, 5
        %v635 = vrot.slane %v634, 4
        %v636 = vrot.slane %v614, 5
        %v637 = vrot.slane %v636, 4
        %v638 = vrot.slane %v615, 5
        %v639 = vrot.slane %v638, 4
        %v648 = vadd.f32 %v598, %v625
        %v649 = vadd.f32 %v599, %v627
        %v650 = vadd.f32 %v600, %v629
        %v651 = vadd.f32 %v601, %v631
        %v652 = vadd.f32 %v602, %v633
        %v653 = vadd.f32 %v603, %v635
        %v654 = vadd.f32 %v604, %v637
        %v655 = vadd.f32 %v605, %v639
        %s656 = sld [smem:[#allocation2 + $0x8]]
        %v657 = vstv %s656
        %v658 = vmul.f32 %v657, %v161
        %v659 = vmul.f32 %v657, %v162
        %v660 = vmul.f32 %v657, %v163
        %v661 = vmul.f32 %v657, %v164
        %v662 = vmul.f32 %v657, %v165
        %v663 = vmul.f32 %v657, %v166
        %v664 = vmul.f32 %v657, %v167
        %v665 = vmul.f32 %v657, %v168
        %v674 = vrot.slane %v658, 6
        %v675 = vrot.slane %v674, 4
        %v676 = vrot.slane %v659, 6
        %v677 = vrot.slane %v676, 4
        %v678 = vrot.slane %v660, 6
        %v679 = vrot.slane %v678, 4
        %v680 = vrot.slane %v661, 6
        %v681 = vrot.slane %v680, 4
        %v682 = vrot.slane %v662, 6
        %v683 = vrot.slane %v682, 4
        %v684 = vrot.slane %v663, 6
        %v685 = vrot.slane %v684, 4
        %v686 = vrot.slane %v664, 6
        %v687 = vrot.slane %v686, 4
        %v688 = vrot.slane %v665, 6
        %v689 = vrot.slane %v688, 4
        %v698 = vadd.f32 %v648, %v675
        %v699 = vadd.f32 %v649, %v677
        %v700 = vadd.f32 %v650, %v679
        %v701 = vadd.f32 %v651, %v681
        %v702 = vadd.f32 %v652, %v683
        %v703 = vadd.f32 %v653, %v685
        %v704 = vadd.f32 %v654, %v687
        %v705 = vadd.f32 %v655, %v689
        %v715 = vunpack.c.l.s4 1966171168
        %v716 = vunpack.c.0.s8 %v715
        %v717 = vlaneseq
        %v718 = vshrl.u32 %v717, 7
        %v719 = vsub.s32 %v716, %v718
        %v720 = vrot.slane %v698, %v719
        %v722 = vunpack.c.l.s4 1966171168
        %v723 = vunpack.c.0.s8 %v722
        %v724 = vlaneseq
        %v725 = vshrl.u32 %v724, 7
        %v726 = vsub.s32 %v723, %v725
        %v727 = vrot.slane %v699, %v726
        %v729 = vunpack.c.l.s4 1966171168
        %v730 = vunpack.c.0.s8 %v729
        %v731 = vlaneseq
        %v732 = vshrl.u32 %v731, 7
        %v733 = vsub.s32 %v730, %v732
        %v734 = vrot.slane %v700, %v733
        %v736 = vunpack.c.l.s4 1966171168
        %v737 = vunpack.c.0.s8 %v736
        %v738 = vlaneseq
        %v739 = vshrl.u32 %v738, 7
        %v740 = vsub.s32 %v737, %v739
        %v741 = vrot.slane %v701, %v740
        %v742 = vcombine.low %v720, %v727
        %v743 = vcombine.low %v734, %v741
        %v745 = vunpack.c.l.s4 1966171168
        %v746 = vunpack.c.0.s8 %v745
        %v747 = vlaneseq
        %v748 = vshrl.u32 %v747, 7
        %v749 = vsub.s32 %v746, %v748
        %v750 = vrot.slane %v742, %v749
        %v752 = vunpack.c.l.s4 1966171168
        %v753 = vunpack.c.0.s8 %v752
        %v754 = vlaneseq
        %v755 = vshrl.u32 %v754, 7
        %v756 = vsub.s32 %v753, %v755
        %v757 = vrot.slane %v743, %v756
        %v758 = vcombine.low %v750, %v757
        %v760 = vunpack.c.l.s4 1966171168
        %v761 = vunpack.c.0.s8 %v760
        %v762 = vlaneseq
        %v763 = vshrl.u32 %v762, 7
        %v764 = vsub.s32 %v761, %v763
        %v765 = vrot.slane %v702, %v764
        %v767 = vunpack.c.l.s4 1966171168
        %v768 = vunpack.c.0.s8 %v767
        %v769 = vlaneseq
        %v770 = vshrl.u32 %v769, 7
        %v771 = vsub.s32 %v768, %v770
        %v772 = vrot.slane %v703, %v771
        %v774 = vunpack.c.l.s4 1966171168
        %v775 = vunpack.c.0.s8 %v774
        %v776 = vlaneseq
        %v777 = vshrl.u32 %v776, 7
        %v778 = vsub.s32 %v775, %v777
        %v779 = vrot.slane %v704, %v778
        %v781 = vunpack.c.l.s4 1966171168
        %v782 = vunpack.c.0.s8 %v781
        %v783 = vlaneseq
        %v784 = vshrl.u32 %v783, 7
        %v785 = vsub.s32 %v782, %v784
        %v786 = vrot.slane %v705, %v785
        %v787 = vcombine.low %v765, %v772
        %v788 = vcombine.low %v779, %v786
        %v790 = vunpack.c.l.s4 1966171168
        %v791 = vunpack.c.0.s8 %v790
        %v792 = vlaneseq
        %v793 = vshrl.u32 %v792, 7
        %v794 = vsub.s32 %v791, %v793
        %v795 = vrot.slane %v787, %v794
        %v797 = vunpack.c.l.s4 1966171168
        %v798 = vunpack.c.0.s8 %v797
        %v799 = vlaneseq
        %v800 = vshrl.u32 %v799, 7
        %v801 = vsub.s32 %v798, %v800
        %v802 = vrot.slane %v788, %v801
        %v803 = vcombine.low %v795, %v802
        %s806 = scalar_lea.vmem %s159, 2
        %807 = vst [vmem:[%s806] ss:$4 sm:$0xff] %v758
        %s808 = scalar_lea.vmem %s159, 34
        %809 = vst [vmem:[%s808] ss:$4 sm:$0xff] %v803
        %s810 = smul.u32 16, %s14
        %p811 = scmp.lt.s32.totalorder %s810, 31
        %s812 = scalar_select %p811, %s810, 31
        %s813 = smul.addr %s812, 4
        %s814 = scalar_lea.vmem %s2, %s813
        // Predicated region
        $region33: #{_rotate_points_pallas.1} parent=27 // pred_check
          %p815 = pneg %p79
        $region34: #{_rotate_points_pallas.1} parent=27 // pred_check_branch
          %817 = sbr.rel (%p815) target = $region36
        $region35: #{_rotate_points_pallas.1} parent=27 // pred_region
          %s818 = smul.u32 16, %s14
        $region36: #{_rotate_points_pallas.1} parent=27 // pred_fallthru
          _
      $region28: #{_rotate_points_pallas.1} parent=5 // pred_fallthru
        _
      %p819 = scmp.le.s32.totalorder 2, %s9
      // Predicated region
      $region37: #{_rotate_points_pallas.1} parent=5 // pred_check
        %p820 = pneg %p819
      $region38: #{_rotate_points_pallas.1} parent=5 // pred_check_branch
        %822 = sbr.rel (%p820) target = $region40
      $region39: #{_rotate_points_pallas.1} parent=5 // pred_region
        %s823 = ssub.s32 %s9, 2
        // Predicated region
        $region41: #{_rotate_points_pallas.1} parent=39 // pred_check
          %p824 = pneg %p85
        $region42: #{_rotate_points_pallas.1} parent=39 // pred_check_branch
          %826 = sbr.rel (%p824) target = $region44
        $region43: #{_rotate_points_pallas.1} parent=39 // pred_region
          %s827 = smul.u32 16, %s15
          %p828 = scmp.lt.s32.totalorder %s827, 31
          %s829 = scalar_select %p828, %s827, 31
          %s830 = smul.addr %s829, 4
          %s831 = scalar_lea.vmem %s2, %s830
        $region44: #{_rotate_points_pallas.1} parent=39 // pred_fallthru
          _
      $region40: #{_rotate_points_pallas.1} parent=5 // pred_fallthru
        _
    $region6: #{_rotate_points_pallas.1} parent=1 // loop_footer
      %s13 = sadd.s32 1, %s9
    $region7: #{_rotate_points_pallas.1} parent=1 // loop_footer_branch
      %8 = sbr.rel target = $region3
    $region8: #{_rotate_points_pallas.1} parent=1 // loop_exit
      _
    %832 = vsyncpa [#allocation3], 1
    %s833 = scalar_lea.sflag [#allocation3], 1
    %834 = vsyncpa %s833, 1

</llo_original>
